<compile_context>
chip_gen: v7x
topology: tpu7x:2x2x1
jax: 0.10.0
libtpu: 0.0.40
codegen_flags: <defaults>
</compile_context>

<pallas_src>
import jax
import jax.numpy as jnp
from jax.experimental import pallas as pl
from jax.experimental.pallas import tpu as pltpu


MAX_TILE_N = 16384  # rows per grid step; ~4.5 MiB VMEM working set, fits every gen


def spatial_encoder_kernel(x_ref, w1_ref, b1_ref, w2_ref, b2_ref, o_ref):
    # x_ref:  (TILE_N, 2)
    # w1_ref: (2, HIDDEN)    b1_ref: (1, HIDDEN)
    # w2_ref: (HIDDEN, HEAD) b2_ref: (1, HEAD)
    # o_ref:  (TILE_N, HEAD)
    x = x_ref[...]
    # Layer 1: K=2 contraction as two VPU broadcast FMAs (the MXU would be
    # wasted on a 2-deep contraction).
    h = x[:, 0:1] * w1_ref[0:1, :] + x[:, 1:2] * w1_ref[1:2, :] + b1_ref[...]
    h = jnp.maximum(h, 0.0)                                # ReLU, (TILE_N, HIDDEN)
    # Layer 2 on the MXU; result lands directly in (TILE_N, HEAD).
    out = jnp.dot(h, w2_ref[...], preferred_element_type=jnp.float32) + b2_ref[...]
    o_ref[...] = out.astype(o_ref.dtype)


def _round_up(x, m):
    return ((x + m - 1) // m) * m


def spatial_encoder(state, w1, b1, w2, b2, *, tile_n=None, out_dtype=None):
    """state: (N, 2); w1: (2, H); b1: (H,); w2: (H, D); b2: (D,) -> (N, D)."""
    N, two = state.shape
    assert two == 2
    hidden = w1.shape[1]
    head = w2.shape[1]
    # TODO(synk): pass out_dtype=jnp.bfloat16 if the downstream consumer accepts
    # it -- halves the dominant output HBM stream (biggest relative win on v5e).
    out_dtype = state.dtype if out_dtype is None else jnp.dtype(out_dtype)

    if tile_n is None:
        if N <= MAX_TILE_N:
            # Single full-extent tile: no row padding, one grid step.
            tile_n = max(N, 1)
        else:
            # Keep >= 2 tiles (even count) so the "parallel" axis can shard
            # across v7x's two TensorCores; tile is a multiple of 256 close to
            # cdiv(N, num_tiles) (not a power of two -> minimal padded rows).
            num_tiles = pl.cdiv(N, MAX_TILE_N)
            num_tiles += num_tiles % 2
            tile_n = _round_up(pl.cdiv(N, num_tiles), 256)
    elif tile_n != N and tile_n % 128 != 0:
        raise ValueError("tile_n must equal N or be a multiple of 128")

    num_tiles = pl.cdiv(N, tile_n)

    b1_row = b1.reshape(1, hidden)
    b2_row = b2.reshape(1, head)

    n_work = num_tiles * tile_n          # rows actually streamed (incl. ragged pad)
    item_in = jnp.dtype(state.dtype).itemsize
    item_out = jnp.dtype(out_dtype).itemsize
    cost = pl.CostEstimate(
        flops=2 * n_work * hidden * (2 + head) + n_work * hidden,
        transcendentals=0,
        bytes_accessed=(item_in * n_work * 2 + item_out * n_work * head
                        + 4 * (2 * hidden + hidden + hidden * head + head)),
    )

    return pl.pallas_call(
        spatial_encoder_kernel,
        out_shape=jax.ShapeDtypeStruct((N, head), out_dtype),
        grid_spec=pltpu.PrefetchScalarGridSpec(
            num_scalar_prefetch=0,
            grid=(num_tiles,),
            in_specs=[
                pl.BlockSpec((tile_n, 2), lambda i: (i, 0)),      # x row tile
                pl.BlockSpec((2, hidden), lambda i: (0, 0)),      # W1 (resident)
                pl.BlockSpec((1, hidden), lambda i: (0, 0)),      # b1
                pl.BlockSpec((hidden, head), lambda i: (0, 0)),   # W2 (resident)
                pl.BlockSpec((1, head), lambda i: (0, 0)),        # b2
            ],
            out_specs=pl.BlockSpec((tile_n, head), lambda i: (i, 0)),
        ),
        compiler_params=pltpu.CompilerParams(
            dimension_semantics=("parallel",),
        ),
        cost_estimate=cost,
    )(state, w1, b1_row, w2, b2_row)


def spatial_encoder_ref(state, w1, b1, w2, b2):
    h = jnp.maximum(state @ w1 + b1, 0.0)
    return h @ w2 + b2


if __name__ == "__main__":
    key = jax.random.PRNGKey(0)
    k_x, k_w1, k_b1, k_w2, k_b2 = jax.random.split(key, 5)

    N = 128          # number of sampled locations
    HIDDEN = 32      # hidden_dim
    HEAD = 16        # head_dim

    # Deterministic init mimicking PyTorch nn.Linear default U(-1/sqrt(fan_in), .)
    lim1 = 1.0 / jnp.sqrt(2.0)
    lim2 = 1.0 / jnp.sqrt(float(HIDDEN))
    w1 = jax.random.uniform(k_w1, (2, HIDDEN), jnp.float32, -lim1, lim1)
    b1 = jax.random.uniform(k_b1, (HIDDEN,), jnp.float32, -lim1, lim1)
    w2 = jax.random.uniform(k_w2, (HIDDEN, HEAD), jnp.float32, -lim2, lim2)
    b2 = jax.random.uniform(k_b2, (HEAD,), jnp.float32, -lim2, lim2)

    state = jax.random.normal(k_x, (N, 2), jnp.float32)
    out = jax.block_until_ready(spatial_encoder(state, w1, b1, w2, b2))
    ref = spatial_encoder_ref(state, w1, b1, w2, b2)
    assert out.shape == (N, HEAD)
    assert jnp.allclose(out, ref, atol=1e-5, rtol=1e-5), "mismatch vs reference"

    # Non-multiple-of-128 N: single full-extent tile, no padding, no slicing.
    N2 = 200
    state2 = jax.random.normal(k_x, (N2, 2), jnp.float32)
    out2 = jax.block_until_ready(spatial_encoder(state2, w1, b1, w2, b2))
    ref2 = spatial_encoder_ref(state2, w1, b1, w2, b2)
    assert out2.shape == (N2, HEAD)
    assert jnp.allclose(out2, ref2, atol=1e-5, rtol=1e-5), "mismatch (full tile)"

    # Force the multi-tile ragged path (Pallas partial-block masking on the
    # last tile) with a small explicit tile.
    out3 = jax.block_until_ready(
        spatial_encoder(state2, w1, b1, w2, b2, tile_n=128))
    assert out3.shape == (N2, HEAD)
    assert jnp.allclose(out3, ref2, atol=1e-5, rtol=1e-5), "mismatch (ragged tiles)"

    print("KERNEL_OK")
</pallas_src>

<mosaic_0001>
module attributes {stable_mosaic.version = 11 : i64} {
  func.func @spatial_encoder_kernel(%arg0: i32, %arg1: memref<128x2xf32, #tpu.memory_space<vmem>>, %arg2: memref<2x32xf32, #tpu.memory_space<vmem>>, %arg3: memref<1x32xf32, #tpu.memory_space<vmem>>, %arg4: memref<32x16xf32, #tpu.memory_space<vmem>>, %arg5: memref<1x16xf32, #tpu.memory_space<vmem>>, %arg6: memref<128x16xf32, #tpu.memory_space<vmem>>) attributes {dimension_semantics = [#tpu.dimension_semantics<parallel>], iteration_bounds = array<i64: 1>, scalar_prefetch = 0 : i64, scratch_operands = 0 : i64, tpu.core_type = #tpu.core_type<tc>, window_params = [{transform_indices = @transform_0, window_bounds = array<i64: 128, 2>}, {pipeline_mode = #tpu.pipeline_mode<synchronous>, transform_indices = @transform_1, window_bounds = array<i64: 2, 32>}, {pipeline_mode = #tpu.pipeline_mode<synchronous>, transform_indices = @transform_2, window_bounds = array<i64: 1, 32>}, {pipeline_mode = #tpu.pipeline_mode<synchronous>, transform_indices = @transform_3, window_bounds = array<i64: 32, 16>}, {pipeline_mode = #tpu.pipeline_mode<synchronous>, transform_indices = @transform_4, window_bounds = array<i64: 1, 16>}, {transform_indices = @transform_5, window_bounds = array<i64: 128, 16>}]} {
    %c0 = arith.constant 0 : index
    %c0_0 = arith.constant 0 : index
    %0 = vector.load %arg1[%c0, %c0_0] : memref<128x2xf32, #tpu.memory_space<vmem>>, vector<128x2xf32>
    %1 = vector.extract_strided_slice %0 {offsets = [0, 0], sizes = [128, 1], strides = [1, 1]} : vector<128x2xf32> to vector<128x1xf32>
    %c0_1 = arith.constant 0 : index
    %c0_2 = arith.constant 0 : index
    %2 = vector.load %arg2[%c0_1, %c0_2] : memref<2x32xf32, #tpu.memory_space<vmem>>, vector<1x32xf32>
    %3 = vector.broadcast %1 : vector<128x1xf32> to vector<128x32xf32>
    %4 = vector.broadcast %2 : vector<1x32xf32> to vector<128x32xf32>
    %5 = arith.mulf %3, %4 : vector<128x32xf32>
    %6 = vector.extract_strided_slice %0 {offsets = [0, 1], sizes = [128, 1], strides = [1, 1]} : vector<128x2xf32> to vector<128x1xf32>
    %c1 = arith.constant 1 : index
    %c0_3 = arith.constant 0 : index
    %7 = vector.load %arg2[%c1, %c0_3] : memref<2x32xf32, #tpu.memory_space<vmem>>, vector<1x32xf32>
    %8 = vector.broadcast %6 : vector<128x1xf32> to vector<128x32xf32>
    %9 = vector.broadcast %7 : vector<1x32xf32> to vector<128x32xf32>
    %10 = arith.mulf %8, %9 : vector<128x32xf32>
    %11 = arith.addf %5, %10 : vector<128x32xf32>
    %c0_4 = arith.constant 0 : index
    %c0_5 = arith.constant 0 : index
    %12 = vector.load %arg3[%c0_4, %c0_5] : memref<1x32xf32, #tpu.memory_space<vmem>>, vector<1x32xf32>
    %13 = vector.broadcast %12 : vector<1x32xf32> to vector<128x32xf32>
    %14 = arith.addf %11, %13 : vector<128x32xf32>
    %cst = arith.constant 0.000000e+00 : f32
    %15 = vector.broadcast %cst : f32 to vector<128x32xf32>
    %16 = arith.maximumf %14, %15 : vector<128x32xf32>
    %c0_6 = arith.constant 0 : index
    %c0_7 = arith.constant 0 : index
    %17 = vector.load %arg4[%c0_6, %c0_7] : memref<32x16xf32, #tpu.memory_space<vmem>>, vector<32x16xf32>
    %cst_8 = arith.constant dense<0.000000e+00> : vector<128x16xf32>
    %18 = tpu.matmul %16, %17, %cst_8 {dimension_numbers = #tpu.dot_dimension_numbers<[1], [0], [0], [1], [0, 0, 1, 1], [], []>} : vector<128x32xf32>, vector<32x16xf32>, vector<128x16xf32> -> vector<128x16xf32>
    %c0_9 = arith.constant 0 : index
    %c0_10 = arith.constant 0 : index
    %19 = vector.load %arg5[%c0_9, %c0_10] : memref<1x16xf32, #tpu.memory_space<vmem>>, vector<1x16xf32>
    %20 = vector.broadcast %19 : vector<1x16xf32> to vector<128x16xf32>
    %21 = arith.addf %18, %20 : vector<128x16xf32>
    %c0_11 = arith.constant 0 : index
    %c0_12 = arith.constant 0 : index
    %22 = vector.load %arg6[%c0_11, %c0_12] : memref<128x16xf32, #tpu.memory_space<vmem>>, vector<128x16xf32>
    tpu.vector_store %arg6[%c0_11, %c0_12], %21 {strides = array<i32>} : memref<128x16xf32, #tpu.memory_space<vmem>>, vector<128x16xf32>,
    return
  }
  func.func @transform_0(%arg0: i32) -> (i32, i32) {
    %c0_i32 = arith.constant 0 : i32
    %c0_i32_0 = arith.constant 0 : i32
    return %arg0, %c0_i32 : i32, i32
  }
  func.func @transform_1(%arg0: i32) -> (i32, i32) {
    %c0_i32 = arith.constant 0 : i32
    %c0_i32_0 = arith.constant 0 : i32
    %c0_i32_1 = arith.constant 0 : i32
    return %c0_i32, %c0_i32_0 : i32, i32
  }
  func.func @transform_2(%arg0: i32) -> (i32, i32) {
    %c0_i32 = arith.constant 0 : i32
    %c0_i32_0 = arith.constant 0 : i32
    %c0_i32_1 = arith.constant 0 : i32
    return %c0_i32, %c0_i32_0 : i32, i32
  }
  func.func @transform_3(%arg0: i32) -> (i32, i32) {
    %c0_i32 = arith.constant 0 : i32
    %c0_i32_0 = arith.constant 0 : i32
    %c0_i32_1 = arith.constant 0 : i32
    return %c0_i32, %c0_i32_0 : i32, i32
  }
  func.func @transform_4(%arg0: i32) -> (i32, i32) {
    %c0_i32 = arith.constant 0 : i32
    %c0_i32_0 = arith.constant 0 : i32
    %c0_i32_1 = arith.constant 0 : i32
    return %c0_i32, %c0_i32_0 : i32, i32
  }
  func.func @transform_5(%arg0: i32) -> (i32, i32) {
    %c0_i32 = arith.constant 0 : i32
    %c0_i32_0 = arith.constant 0 : i32
    return %arg0, %c0_i32 : i32, i32
  }
}

</mosaic_0001>

<llo_original>
// kernel: tpu_custom_call.1
$region0: #{tpu_custom_call.1}
  #allocation0 [shape = 'u32[]', space=smem, size = 0x4, offset = 0x4, fixed_abs, tag = 'smem constant byte address 0x4 - core index']
  #allocation1 [shape = 'u32[144,128]{1,0:T(1,128)}', space=vmem, size = 0x12000, scoped, tag = 'internal scratch']
  %s0 = inlined_call_operand.vmem [shape: f32[128,2], index: 0, kind: input, shape index: {}]
  %s1 = inlined_call_operand.vmem [shape: f32[2,32], index: 1, kind: input, shape index: {}]
  %s2 = inlined_call_operand.vmem [shape: f32[1,32], index: 2, kind: input, shape index: {}]
  %s3 = inlined_call_operand.vmem [shape: f32[32,16], index: 3, kind: input, shape index: {}]
  %s4 = inlined_call_operand.vmem [shape: f32[1,16], index: 4, kind: input, shape index: {}]
  %s5 = inlined_call_operand.vmem [shape: f32[128,16], index: 5, kind: output, shape index: {}]
  %s6 = sld [smem:[#allocation0]]
  $region30: #{tpu_custom_call.1} parent=0
    _
  %s8 = ssub.s32 1, %s6
  %s9 = scalar_select 0, %s8, %s6
  // Predicated region
  $region2: #{tpu_custom_call.1} parent=0 // pred_check
    _
  $region3: #{tpu_custom_call.1} parent=0 // pred_check_branch
    %11 = sbr.rel (0) target = $region5
  $region4: #{tpu_custom_call.1} parent=0 // pred_region
    _
  $region5: #{tpu_custom_call.1} parent=0 // pred_fallthru
    _
  // Predicated region
  $region6: #{tpu_custom_call.1} parent=0 // pred_check
    _
  $region7: #{tpu_custom_call.1} parent=0 // pred_check_branch
    %13 = sbr.rel (0) target = $region9
  $region8: #{tpu_custom_call.1} parent=0 // pred_region
    _
  $region9: #{tpu_custom_call.1} parent=0 // pred_fallthru
    _
  // Predicated region
  $region10: #{tpu_custom_call.1} parent=0 // pred_check
    _
  $region11: #{tpu_custom_call.1} parent=0 // pred_check_branch
    %15 = sbr.rel (0) target = $region13
  $region12: #{tpu_custom_call.1} parent=0 // pred_region
    _
  $region13: #{tpu_custom_call.1} parent=0 // pred_fallthru
    _
  // Predicated region
  $region14: #{tpu_custom_call.1} parent=0 // pred_check
    _
  $region15: #{tpu_custom_call.1} parent=0 // pred_check_branch
    %17 = sbr.rel (0) target = $region17
  $region16: #{tpu_custom_call.1} parent=0 // pred_region
    _
  $region17: #{tpu_custom_call.1} parent=0 // pred_fallthru
    _
  // Predicated region
  $region18: #{tpu_custom_call.1} parent=0 // pred_check
    _
  $region19: #{tpu_custom_call.1} parent=0 // pred_check_branch
    %19 = sbr.rel (0) target = $region21
  $region20: #{tpu_custom_call.1} parent=0 // pred_region
    _
  $region21: #{tpu_custom_call.1} parent=0 // pred_fallthru
    _
  %v20 = vld [vmem:[%s0] sm:$0xff]
  %v21 = vld [vmem:[%s0 + $0x8] sm:$0xff]
  %v22 = vld [vmem:[%s0 + $0x10] sm:$0xff]
  %v23 = vld [vmem:[%s0 + $0x18] sm:$0xff]
  %v24 = vld [vmem:[%s0 + $0x20] sm:$0xff]
  %v25 = vld [vmem:[%s0 + $0x28] sm:$0xff]
  %v26 = vld [vmem:[%s0 + $0x30] sm:$0xff]
  %v27 = vld [vmem:[%s0 + $0x38] sm:$0xff]
  %v28 = vld [vmem:[%s0 + $0x40] sm:$0xff]
  %v29 = vld [vmem:[%s0 + $0x48] sm:$0xff]
  %v30 = vld [vmem:[%s0 + $0x50] sm:$0xff]
  %v31 = vld [vmem:[%s0 + $0x58] sm:$0xff]
  %v32 = vld [vmem:[%s0 + $0x60] sm:$0xff]
  %v33 = vld [vmem:[%s0 + $0x68] sm:$0xff]
  %v34 = vld [vmem:[%s0 + $0x70] sm:$0xff]
  %v35 = vld [vmem:[%s0 + $0x78] sm:$0xff]
  %v36 = vld [vmem:[%s1] sm:$0x1]
  %38 = vset.pattern.permute.xlu0 0
  %39 = vperm.xlu0 %38, %v20
  %v40 = vpop.permute.xlu0 %39
  %43 = vset.pattern.permute.xlu0 0
  %44 = vperm.xlu0 %43, %v21
  %v45 = vpop.permute.xlu0 %44
  %48 = vset.pattern.permute.xlu0 0
  %49 = vperm.xlu0 %48, %v22
  %v50 = vpop.permute.xlu0 %49
  %53 = vset.pattern.permute.xlu0 0
  %54 = vperm.xlu0 %53, %v23
  %v55 = vpop.permute.xlu0 %54
  %58 = vset.pattern.permute.xlu0 0
  %59 = vperm.xlu0 %58, %v24
  %v60 = vpop.permute.xlu0 %59
  %63 = vset.pattern.permute.xlu0 0
  %64 = vperm.xlu0 %63, %v25
  %v65 = vpop.permute.xlu0 %64
  %68 = vset.pattern.permute.xlu0 0
  %69 = vperm.xlu0 %68, %v26
  %v70 = vpop.permute.xlu0 %69
  %73 = vset.pattern.permute.xlu0 0
  %74 = vperm.xlu0 %73, %v27
  %v75 = vpop.permute.xlu0 %74
  %78 = vset.pattern.permute.xlu0 0
  %79 = vperm.xlu0 %78, %v28
  %v80 = vpop.permute.xlu0 %79
  %83 = vset.pattern.permute.xlu0 0
  %84 = vperm.xlu0 %83, %v29
  %v85 = vpop.permute.xlu0 %84
  %88 = vset.pattern.permute.xlu0 0
  %89 = vperm.xlu0 %88, %v30
  %v90 = vpop.permute.xlu0 %89
  %93 = vset.pattern.permute.xlu0 0
  %94 = vperm.xlu0 %93, %v31
  %v95 = vpop.permute.xlu0 %94
  %98 = vset.pattern.permute.xlu0 0
  %99 = vperm.xlu0 %98, %v32
  %v100 = vpop.permute.xlu0 %99
  %103 = vset.pattern.permute.xlu0 0
  %104 = vperm.xlu0 %103, %v33
  %v105 = vpop.permute.xlu0 %104
  %108 = vset.pattern.permute.xlu0 0
  %109 = vperm.xlu0 %108, %v34
  %v110 = vpop.permute.xlu0 %109
  %113 = vset.pattern.permute.xlu0 0
  %114 = vperm.xlu0 %113, %v35
  %v115 = vpop.permute.xlu0 %114
  %v117 = vlaneseq
  %v118 = vshrl.u32 %v117, 7
  %v119 = vsub.s32 0, %v118
  %v120 = vrot.slane %v36, %v119
  %v121 = vmul.f32 %v40, %v120
  %v122 = vmul.f32 %v45, %v120
  %v123 = vmul.f32 %v50, %v120
  %v124 = vmul.f32 %v55, %v120
  %v125 = vmul.f32 %v60, %v120
  %v126 = vmul.f32 %v65, %v120
  %v127 = vmul.f32 %v70, %v120
  %v128 = vmul.f32 %v75, %v120
  %v129 = vmul.f32 %v80, %v120
  %v130 = vmul.f32 %v85, %v120
  %v131 = vmul.f32 %v90, %v120
  %v132 = vmul.f32 %v95, %v120
  %v133 = vmul.f32 %v100, %v120
  %v134 = vmul.f32 %v105, %v120
  %v135 = vmul.f32 %v110, %v120
  %v136 = vmul.f32 %v115, %v120
  %v137 = vld [vmem:[%s1 + $0x1] sm:$0x1]
  %138 = vset.pattern.permute.xlu0 1
  %139 = vperm.xlu0 %138, %v20
  %v140 = vpop.permute.xlu0 %139
  %142 = vset.pattern.permute.xlu0 1
  %143 = vperm.xlu0 %142, %v21
  %v144 = vpop.permute.xlu0 %143
  %146 = vset.pattern.permute.xlu0 1
  %147 = vperm.xlu0 %146, %v22
  %v148 = vpop.permute.xlu0 %147
  %150 = vset.pattern.permute.xlu0 1
  %151 = vperm.xlu0 %150, %v23
  %v152 = vpop.permute.xlu0 %151
  %154 = vset.pattern.permute.xlu0 1
  %155 = vperm.xlu0 %154, %v24
  %v156 = vpop.permute.xlu0 %155
  %158 = vset.pattern.permute.xlu0 1
  %159 = vperm.xlu0 %158, %v25
  %v160 = vpop.permute.xlu0 %159
  %162 = vset.pattern.permute.xlu0 1
  %163 = vperm.xlu0 %162, %v26
  %v164 = vpop.permute.xlu0 %163
  %166 = vset.pattern.permute.xlu0 1
  %167 = vperm.xlu0 %166, %v27
  %v168 = vpop.permute.xlu0 %167
  %170 = vset.pattern.permute.xlu0 1
  %171 = vperm.xlu0 %170, %v28
  %v172 = vpop.permute.xlu0 %171
  %174 = vset.pattern.permute.xlu0 1
  %175 = vperm.xlu0 %174, %v29
  %v176 = vpop.permute.xlu0 %175
  %178 = vset.pattern.permute.xlu0 1
  %179 = vperm.xlu0 %178, %v30
  %v180 = vpop.permute.xlu0 %179
  %182 = vset.pattern.permute.xlu0 1
  %183 = vperm.xlu0 %182, %v31
  %v184 = vpop.permute.xlu0 %183
  %186 = vset.pattern.permute.xlu0 1
  %187 = vperm.xlu0 %186, %v32
  %v188 = vpop.permute.xlu0 %187
  %190 = vset.pattern.permute.xlu0 1
  %191 = vperm.xlu0 %190, %v33
  %v192 = vpop.permute.xlu0 %191
  %194 = vset.pattern.permute.xlu0 1
  %195 = vperm.xlu0 %194, %v34
  %v196 = vpop.permute.xlu0 %195
  %198 = vset.pattern.permute.xlu0 1
  %199 = vperm.xlu0 %198, %v35
  %v200 = vpop.permute.xlu0 %199
  %v202 = vlaneseq
  %v203 = vshrl.u32 %v202, 7
  %v204 = vsub.s32 0, %v203
  %v205 = vrot.slane %v137, %v204
  %v206 = vmul.f32 %v140, %v205
  %v207 = vmul.f32 %v144, %v205
  %v208 = vmul.f32 %v148, %v205
  %v209 = vmul.f32 %v152, %v205
  %v210 = vmul.f32 %v156, %v205
  %v211 = vmul.f32 %v160, %v205
  %v212 = vmul.f32 %v164, %v205
  %v213 = vmul.f32 %v168, %v205
  %v214 = vmul.f32 %v172, %v205
  %v215 = vmul.f32 %v176, %v205
  %v216 = vmul.f32 %v180, %v205
  %v217 = vmul.f32 %v184, %v205
  %v218 = vmul.f32 %v188, %v205
  %v219 = vmul.f32 %v192, %v205
  %v220 = vmul.f32 %v196, %v205
  %v221 = vmul.f32 %v200, %v205
  %v222 = vadd.f32 %v121, %v206
  %v223 = vadd.f32 %v122, %v207
  %v224 = vadd.f32 %v123, %v208
  %v225 = vadd.f32 %v124, %v209
  %v226 = vadd.f32 %v125, %v210
  %v227 = vadd.f32 %v126, %v211
  %v228 = vadd.f32 %v127, %v212
  %v229 = vadd.f32 %v128, %v213
  %v230 = vadd.f32 %v129, %v214
  %v231 = vadd.f32 %v130, %v215
  %v232 = vadd.f32 %v131, %v216
  %v233 = vadd.f32 %v132, %v217
  %v234 = vadd.f32 %v133, %v218
  %v235 = vadd.f32 %v134, %v219
  %v236 = vadd.f32 %v135, %v220
  %v237 = vadd.f32 %v136, %v221
  %v238 = vld [vmem:[%s2] sm:$0x1]
  %v240 = vlaneseq
  %v241 = vshrl.u32 %v240, 7
  %v242 = vsub.s32 0, %v241
  %v243 = vrot.slane %v238, %v242
  %v245 = vadd.f32 %v222, %v243
  %v246 = vadd.f32 %v223, %v243
  %v247 = vadd.f32 %v224, %v243
  %v248 = vadd.f32 %v225, %v243
  %v249 = vadd.f32 %v226, %v243
  %v250 = vadd.f32 %v227, %v243
  %v251 = vadd.f32 %v228, %v243
  %v252 = vadd.f32 %v229, %v243
  %v253 = vadd.f32 %v230, %v243
  %v254 = vadd.f32 %v231, %v243
  %v255 = vadd.f32 %v232, %v243
  %v256 = vadd.f32 %v233, %v243
  %v257 = vadd.f32 %v234, %v243
  %v258 = vadd.f32 %v235, %v243
  %v259 = vadd.f32 %v236, %v243
  %v260 = vadd.f32 %v237, %v243
  %v261 = vmax.f32 %v245, 0.0
  %v262 = vmax.f32 %v246, 0.0
  %v263 = vmax.f32 %v247, 0.0
  %v264 = vmax.f32 %v248, 0.0
  %v265 = vmax.f32 %v249, 0.0
  %v266 = vmax.f32 %v250, 0.0
  %v267 = vmax.f32 %v251, 0.0
  %v268 = vmax.f32 %v252, 0.0
  %v269 = vmax.f32 %v253, 0.0
  %v270 = vmax.f32 %v254, 0.0
  %v271 = vmax.f32 %v255, 0.0
  %v272 = vmax.f32 %v256, 0.0
  %v273 = vmax.f32 %v257, 0.0
  %v274 = vmax.f32 %v258, 0.0
  %v275 = vmax.f32 %v259, 0.0
  %v276 = vmax.f32 %v260, 0.0
  %v277 = vld [vmem:[%s3] sm:$0xff]
  %v278 = vld [vmem:[%s3 + $0x8] sm:$0xff]
  %v279 = vld [vmem:[%s3 + $0x10] sm:$0xff]
  %v280 = vld [vmem:[%s3 + $0x18] sm:$0xff]
  %v281 = vld [vmem:[%s4] sm:$0x1]
  %v283 = vlaneseq
  %v284 = vshrl.u32 %v283, 7
  %v285 = vsub.s32 0, %v284
  %v286 = vrot.slane %v281, %v285
  %vm288 = vcmask 261120
  %v290 = vsel %vm288, %v261, 0
  %v293 = vsel %vm288, %v262, 0
  %v296 = vsel %vm288, %v263, 0
  %v299 = vsel %vm288, %v264, 0
  %v302 = vsel %vm288, %v265, 0
  %v305 = vsel %vm288, %v266, 0
  %v308 = vsel %vm288, %v267, 0
  %v311 = vsel %vm288, %v268, 0
  %v314 = vsel %vm288, %v269, 0
  %v317 = vsel %vm288, %v270, 0
  %v320 = vsel %vm288, %v271, 0
  %v323 = vsel %vm288, %v272, 0
  %v326 = vsel %vm288, %v273, 0
  %v329 = vsel %vm288, %v274, 0
  %v332 = vsel %vm288, %v275, 0
  %v335 = vsel %vm288, %v276, 0
  %337 = vmatprep.subr.mxu0 0.0
  %338 = vmatpush1.msra.mxu0 %v277
  %339 = vmatprep.subr.mxu0 0.0
  %340 = vmatpush1.msra.mxu0 %v278
  %341 = vmatprep.subr.mxu0 0.0
  %342 = vmatpush1.msra.mxu0 %v279
  %343 = vmatprep.subr.mxu0 0.0
  %344 = vmatpush1.msra.mxu0 %v280
  %345 = vmatprep.subr.mxu0 0.0
  %346 = vmatpush1.msra.mxu0 0.0
  %347 = vmatprep.subr.mxu0 0.0
  %348 = vmatpush1.msra.mxu0 0.0
  %349 = vmatprep.subr.mxu0 0.0
  %350 = vmatpush1.msra.mxu0 0.0
  %351 = vmatprep.subr.mxu0 0.0
  %352 = vmatpush1.msra.mxu0 0.0
  %353 = vmatprep.subr.mxu0 0.0
  %354 = vmatpush1.msra.mxu0 0.0
  %355 = vmatprep.subr.mxu0 0.0
  %356 = vmatpush1.msra.mxu0 0.0
  %357 = vmatprep.subr.mxu0 0.0
  %358 = vmatpush1.msra.mxu0 0.0
  %359 = vmatprep.subr.mxu0 0.0
  %360 = vmatpush1.msra.mxu0 0.0
  %361 = vmatprep.subr.mxu0 0.0
  %362 = vmatpush1.msra.mxu0 0.0
  %363 = vmatprep.subr.mxu0 0.0
  %364 = vmatpush1.msra.mxu0 0.0
  %365 = vmatprep.subr.mxu0 0.0
  %366 = vmatpush1.msra.mxu0 0.0
  %367 = vmatprep.subr.mxu0 0.0
  %368 = vmatpush1.msra.mxu0 0.0
  %369 = vmatprep.subr.mxu0 0.0
  %370 = vmatpush1.msra.mxu0 0.0
  %371 = vmatprep.subr.mxu0 0.0
  %372 = vmatpush1.msra.mxu0 0.0
  %373 = vmatprep.subr.mxu0 0.0
  %374 = vmatpush1.msra.mxu0 0.0
  %375 = vmatprep.subr.mxu0 0.0
  %376 = vmatpush1.msra.mxu0 0.0
  %377 = vmatprep.subr.mxu0 0.0
  %378 = vmatpush1.msra.mxu0 0.0
  %379 = vmatprep.subr.mxu0 0.0
  %380 = vmatpush1.msra.mxu0 0.0
  %381 = vmatprep.subr.mxu0 0.0
  %382 = vmatpush1.msra.mxu0 0.0
  %383 = vmatprep.subr.mxu0 0.0
  %384 = vmatpush1.msra.mxu0 0.0
  %385 = vmatprep.subr.mxu0 0.0
  %386 = vmatpush1.msra.mxu0 0.0
  %387 = vmatprep.subr.mxu0 0.0
  %388 = vmatpush1.msra.mxu0 0.0
  %389 = vmatprep.subr.mxu0 0.0
  %390 = vmatpush1.msra.mxu0 0.0
  %391 = vmatprep.subr.mxu0 0.0
  %392 = vmatpush1.msra.mxu0 0.0
  %393 = vmatprep.subr.mxu0 0.0
  %394 = vmatpush1.msra.mxu0 0.0
  %395 = vmatprep.subr.mxu0 0.0
  %396 = vmatpush1.msra.mxu0 0.0
  %397 = vmatprep.subr.mxu0 0.0
  %398 = vmatpush1.msra.mxu0 0.0
  %399 = vmatprep.subr.mxu0 0.0
  %400 = vmatpush1.msra.mxu0 0.0
  %401 = vmatprep.mubr.f32.mxu0 0.0
  %402 = vmatmul.mubr.f32.gmra.mrb[0].mxu0 %v290
  %v403 = vpop.f32.mrb[0].mxu0
  %v404 = vadd.f32 %v286, %v403
  %v405 = vpop.f32.mrb[0].mxu0
  %406 = vmatprep.mubr.f32.mxu0 0.0
  %407 = vmatmul.mubr.f32.gmra.mrb[0].mxu0 %v293
  %v408 = vpop.f32.mrb[0].mxu0
  %v409 = vadd.f32 %v286, %v408
  %v410 = vpop.f32.mrb[0].mxu0
  %411 = vmatprep.mubr.f32.mxu0 0.0
  %412 = vmatmul.mubr.f32.gmra.mrb[0].mxu0 %v296
  %v413 = vpop.f32.mrb[0].mxu0
  %v414 = vadd.f32 %v286, %v413
  %v415 = vpop.f32.mrb[0].mxu0
  %416 = vmatprep.mubr.f32.mxu0 0.0
  %417 = vmatmul.mubr.f32.gmra.mrb[0].mxu0 %v299
  %v418 = vpop.f32.mrb[0].mxu0
  %v419 = vadd.f32 %v286, %v418
  %v420 = vpop.f32.mrb[0].mxu0
  %421 = vmatprep.mubr.f32.mxu0 0.0
  %422 = vmatmul.mubr.f32.gmra.mrb[0].mxu0 %v302
  %v423 = vpop.f32.mrb[0].mxu0
  %v424 = vadd.f32 %v286, %v423
  %v425 = vpop.f32.mrb[0].mxu0
  %426 = vmatprep.mubr.f32.mxu0 0.0
  %427 = vmatmul.mubr.f32.gmra.mrb[0].mxu0 %v305
  %v428 = vpop.f32.mrb[0].mxu0
  %v429 = vadd.f32 %v286, %v428
  %v430 = vpop.f32.mrb[0].mxu0
  %431 = vmatprep.mubr.f32.mxu0 0.0
  %432 = vmatmul.mubr.f32.gmra.mrb[0].mxu0 %v308
  %v433 = vpop.f32.mrb[0].mxu0
  %v434 = vadd.f32 %v286, %v433
  %v435 = vpop.f32.mrb[0].mxu0
  %436 = vmatprep.mubr.f32.mxu0 0.0
  %437 = vmatmul.mubr.f32.gmra.mrb[0].mxu0 %v311
  %v438 = vpop.f32.mrb[0].mxu0
  %v439 = vadd.f32 %v286, %v438
  %v440 = vpop.f32.mrb[0].mxu0
  %441 = vmatprep.mubr.f32.mxu0 0.0
  %442 = vmatmul.mubr.f32.gmra.mrb[0].mxu0 %v314
  %v443 = vpop.f32.mrb[0].mxu0
  %v444 = vadd.f32 %v286, %v443
  %v445 = vpop.f32.mrb[0].mxu0
  %446 = vmatprep.mubr.f32.mxu0 0.0
  %447 = vmatmul.mubr.f32.gmra.mrb[0].mxu0 %v317
  %v448 = vpop.f32.mrb[0].mxu0
  %v449 = vadd.f32 %v286, %v448
  %v450 = vpop.f32.mrb[0].mxu0
  %451 = vmatprep.mubr.f32.mxu0 0.0
  %452 = vmatmul.mubr.f32.gmra.mrb[0].mxu0 %v320
  %v453 = vpop.f32.mrb[0].mxu0
  %v454 = vadd.f32 %v286, %v453
  %v455 = vpop.f32.mrb[0].mxu0
  %456 = vmatprep.mubr.f32.mxu0 0.0
  %457 = vmatmul.mubr.f32.gmra.mrb[0].mxu0 %v323
  %v458 = vpop.f32.mrb[0].mxu0
  %v459 = vadd.f32 %v286, %v458
  %v460 = vpop.f32.mrb[0].mxu0
  %461 = vmatprep.mubr.f32.mxu0 0.0
  %462 = vmatmul.mubr.f32.gmra.mrb[0].mxu0 %v326
  %v463 = vpop.f32.mrb[0].mxu0
  %v464 = vadd.f32 %v286, %v463
  %v465 = vpop.f32.mrb[0].mxu0
  %466 = vmatprep.mubr.f32.mxu0 0.0
  %467 = vmatmul.mubr.f32.gmra.mrb[0].mxu0 %v329
  %v468 = vpop.f32.mrb[0].mxu0
  %v469 = vadd.f32 %v286, %v468
  %v470 = vpop.f32.mrb[0].mxu0
  %471 = vmatprep.mubr.f32.mxu0 0.0
  %472 = vmatmul.mubr.f32.gmra.mrb[0].mxu0 %v332
  %v473 = vpop.f32.mrb[0].mxu0
  %v474 = vadd.f32 %v286, %v473
  %v475 = vpop.f32.mrb[0].mxu0
  %476 = vmatprep.mubr.f32.mxu0 0.0
  %477 = vmatmul.mubr.f32.gmra.mrb[0].mxu0 %v335
  %v478 = vpop.f32.mrb[0].mxu0
  %v479 = vadd.f32 %v286, %v478
  %v480 = vpop.f32.mrb[0].mxu0
  %481 = vdwg.mxu0
  %vm482 = vcmask 130048
  %483 = vst.msk [vmem:[%s5] sm:$0xff] %vm482, %v404
  %484 = vst.msk [vmem:[%s5 + $0x8] sm:$0xff] %vm482, %v409
  %485 = vst.msk [vmem:[%s5 + $0x10] sm:$0xff] %vm482, %v414
  %486 = vst.msk [vmem:[%s5 + $0x18] sm:$0xff] %vm482, %v419
  %487 = vst.msk [vmem:[%s5 + $0x20] sm:$0xff] %vm482, %v424
  %488 = vst.msk [vmem:[%s5 + $0x28] sm:$0xff] %vm482, %v429
  %489 = vst.msk [vmem:[%s5 + $0x30] sm:$0xff] %vm482, %v434
  %490 = vst.msk [vmem:[%s5 + $0x38] sm:$0xff] %vm482, %v439
  %491 = vst.msk [vmem:[%s5 + $0x40] sm:$0xff] %vm482, %v444
  %492 = vst.msk [vmem:[%s5 + $0x48] sm:$0xff] %vm482, %v449
  %493 = vst.msk [vmem:[%s5 + $0x50] sm:$0xff] %vm482, %v454
  %494 = vst.msk [vmem:[%s5 + $0x58] sm:$0xff] %vm482, %v459
  %495 = vst.msk [vmem:[%s5 + $0x60] sm:$0xff] %vm482, %v464
  %496 = vst.msk [vmem:[%s5 + $0x68] sm:$0xff] %vm482, %v469
  %497 = vst.msk [vmem:[%s5 + $0x70] sm:$0xff] %vm482, %v474
  %498 = vst.msk [vmem:[%s5 + $0x78] sm:$0xff] %vm482, %v479
  // Predicated region
  $region22: #{tpu_custom_call.1} parent=0 // pred_check
    _
  $region23: #{tpu_custom_call.1} parent=0 // pred_check_branch
    %500 = sbr.rel (0) target = $region25
  $region24: #{tpu_custom_call.1} parent=0 // pred_region
    _
  $region25: #{tpu_custom_call.1} parent=0 // pred_fallthru
    _
  // Predicated region
  $region26: #{tpu_custom_call.1} parent=0 // pred_check
    _
  $region27: #{tpu_custom_call.1} parent=0 // pred_check_branch
    %502 = sbr.rel (0) target = $region29
  $region28: #{tpu_custom_call.1} parent=0 // pred_region
    _
  $region29: #{tpu_custom_call.1} parent=0 // pred_fallthru
    _

</llo_original>
